<compile_context>
chip_gen: v6e
topology: v6e:2x2x1
jax: 0.10.0
libtpu: 0.0.40
codegen_flags: <defaults>
</compile_context>

<pallas_src>
import functools

import jax
import jax.numpy as jnp
from jax.experimental import pallas as pl
from jax.experimental.pallas import tpu as pltpu


def _round_up(x, m):
    return ((x + m - 1) // m) * m


def _rnn_cell_kernel(x_ref, h_ref, wx_ref, wh_ref, b_ref, o_ref, *, nonlinearity):
    """One (tm, tn) output tile: two accumulating dots + fused epilogue."""
    y = jnp.dot(x_ref[...], wx_ref[...], preferred_element_type=jnp.float32)
    y = y + jnp.dot(h_ref[...], wh_ref[...], preferred_element_type=jnp.float32)
    y = y + b_ref[...]                       # pre-summed f32 bias
    if nonlinearity == "tanh":
        y = jnp.tanh(y)                      # EUP slot
    else:                                    # 'relu'
        y = jnp.maximum(y, 0.0)              # VPU
    o_ref[...] = y.astype(o_ref.dtype)       # single lane-dense store


def prepare_rnn_cell_params(wx, bx, wh, bh, *, compute_dtype=None):
    """Pack parameters ONCE (hoist out of any per-timestep path).

    wx : [H, I]  (PyTorch nn.Linear layout)   bx : [H] or None
    wh : [H, H]                                bh : [H] or None
    compute_dtype : dtype used on the MXU (e.g. jnp.bfloat16 to halve weight
                    DMA bytes; f32 accumulation is always used in-kernel).
    Returns (wx_t [I, H_pad], wh_t [H, H_pad], b [1, H_pad] f32, meta).
    """
    hidden_size, input_size = wx.shape
    assert wh.shape == (hidden_size, hidden_size)
    if compute_dtype is None:
        compute_dtype = wx.dtype

    h_pad = _round_up(hidden_size, 128)      # lane-dense output / weight N dim

    wx_t = jnp.zeros((input_size, h_pad), compute_dtype)
    wx_t = wx_t.at[:, :hidden_size].set(wx.T.astype(compute_dtype))
    wh_t = jnp.zeros((hidden_size, h_pad), compute_dtype)
    wh_t = wh_t.at[:, :hidden_size].set(wh.T.astype(compute_dtype))

    if bx is None:
        bx = jnp.zeros((hidden_size,), jnp.float32)
    if bh is None:
        bh = jnp.zeros((hidden_size,), jnp.float32)
    b = jnp.zeros((1, h_pad), jnp.float32)
    b = b.at[0, :hidden_size].set(bx.astype(jnp.float32) + bh.astype(jnp.float32))

    meta = dict(input_size=int(input_size), hidden_size=int(hidden_size),
                h_pad=int(h_pad), compute_dtype=compute_dtype)
    return wx_t, wh_t, b, meta


def _pick_tn(h_pad, grid_m):
    """Largest 128-multiple divisor of h_pad (<=512); prefer >=2 N blocks when
    the M axis has only one block so v7x's two TensorCores both get work."""
    cands = [d for d in range(128, min(512, h_pad) + 1, 128) if h_pad % d == 0]
    tn = max(cands)
    if grid_m == 1 and tn == h_pad and h_pad >= 256:
        smaller = [d for d in cands if d < h_pad]
        if smaller:
            tn = max(smaller)
    return tn


def rnn_cell_forward(x, hx, wx_t, wh_t, b, meta, *, nonlinearity="tanh"):
    """Pallas RNNCell forward.

    x  : [B, input_size],  hx : [B, hidden_size]
    wx_t / wh_t / b / meta : from prepare_rnn_cell_params (computed once).
    returns [B, hidden_size] in x.dtype.
    """
    if nonlinearity not in ("tanh", "relu"):
        raise ValueError("Invalid nonlinearity!")

    B = x.shape[0]
    I = meta["input_size"]
    H = meta["hidden_size"]
    h_pad = meta["h_pad"]
    cdt = meta["compute_dtype"]
    if x.shape[1] != I:
        raise ValueError(f"x has {x.shape[1]} features, expected {I}")
    if hx.shape != (B, H):
        raise ValueError(f"hx shape {hx.shape}, expected {(B, H)}")

    out_dtype = x.dtype
    # Single MXU compute dtype (avoid silent f32*bf16 promotion off the fast path).
    x_c = x.astype(cdt)
    h_c = hx.astype(cdt)

    itemsize = jnp.dtype(cdt).itemsize
    tm_cap = 1024 if itemsize <= 2 else 512
    if B <= tm_cap:
        # Single M block: no row padding, weights streamed from HBM exactly once.
        tm, b_pad = B, B
    else:
        tm = tm_cap
        b_pad = _round_up(B, tm)
        pad = b_pad - B
        x_c = jnp.pad(x_c, ((0, pad), (0, 0)))
        h_c = jnp.pad(h_c, ((0, pad), (0, 0)))

    grid_m = b_pad // tm
    tn = _pick_tn(h_pad, grid_m)
    grid_n = h_pad // tn

    out_itemsize = jnp.dtype(out_dtype).itemsize
    # Double-buffered inputs + double-buffered output tile, plus headroom.
    vmem_bytes = (2 * ((tm * I + tm * H + I * tn + H * tn) * itemsize + tn * 4)
                  + 2 * tm * tn * out_itemsize)
    vmem_limit = min(max(int(vmem_bytes * 1.5) + (4 << 20), 32 << 20), 64 << 20)

    kernel = functools.partial(_rnn_cell_kernel, nonlinearity=nonlinearity)

    out_p = pl.pallas_call(
        kernel,
        out_shape=jax.ShapeDtypeStruct((b_pad, h_pad), out_dtype),
        grid_spec=pltpu.PrefetchScalarGridSpec(
            num_scalar_prefetch=0,
            grid=(grid_m, grid_n),
            in_specs=[
                pl.BlockSpec((tm, I), lambda i, j: (i, 0)),    # x   (unpadded K)
                pl.BlockSpec((tm, H), lambda i, j: (i, 0)),    # hx  (unpadded K)
                pl.BlockSpec((I, tn), lambda i, j: (0, j)),    # Wx^T
                pl.BlockSpec((H, tn), lambda i, j: (0, j)),    # Wh^T
                pl.BlockSpec((1, tn), lambda i, j: (0, j)),    # fused f32 bias
            ],
            out_specs=pl.BlockSpec((tm, tn), lambda i, j: (i, j)),
        ),
        compiler_params=pltpu.CompilerParams(
            dimension_semantics=("parallel", "parallel"),
            vmem_limit_bytes=vmem_limit,
        ),
    )(x_c, h_c, wx_t, wh_t, b)

    out = out_p
    if b_pad != B:
        out = out[:B]
    if h_pad != H:
        out = out[:, :H]
    return out


def _init_linear(key, out_features, in_features, dtype=jnp.float32):
    # Matches PyTorch nn.Linear default init: U(-1/sqrt(fan_in), 1/sqrt(fan_in))
    kw, kb = jax.random.split(key)
    bound = 1.0 / jnp.sqrt(jnp.asarray(in_features, dtype))
    w = jax.random.uniform(kw, (out_features, in_features), dtype,
                           minval=-bound, maxval=bound)
    b = jax.random.uniform(kb, (out_features,), dtype,
                           minval=-bound, maxval=bound)
    return w, b


if __name__ == "__main__":
    key = jax.random.PRNGKey(0)
    k_x, k_h, k_x2h, k_h2h = jax.random.split(key, 4)

    batch = 8
    input_size = 16
    hidden_size = 32

    x = jax.random.normal(k_x, (batch, input_size), jnp.float32)
    hx = jax.random.normal(k_h, (batch, hidden_size), jnp.float32)

    wx, bx = _init_linear(k_x2h, hidden_size, input_size)
    wh, bh = _init_linear(k_h2h, hidden_size, hidden_size)

    # Pure-JAX references.
    pre = x @ wx.T + bx + hx @ wh.T + bh
    y_ref_tanh = jnp.tanh(pre)
    y_ref_relu = jnp.maximum(pre, 0.0)

    # ---- f32 weights (tight tolerance) -------------------------------------
    wx_t, wh_t, bsum, meta = prepare_rnn_cell_params(wx, bx, wh, bh)

    y_tanh = rnn_cell_forward(x, hx, wx_t, wh_t, bsum, meta, nonlinearity="tanh")
    y_tanh = jax.block_until_ready(y_tanh)
    assert y_tanh.shape == (batch, hidden_size)
    assert jnp.allclose(y_tanh, y_ref_tanh, atol=1e-5, rtol=1e-5)

    y_relu = rnn_cell_forward(x, hx, wx_t, wh_t, bsum, meta, nonlinearity="relu")
    y_relu = jax.block_until_ready(y_relu)
    assert jnp.allclose(y_relu, y_ref_relu, atol=1e-5, rtol=1e-5)

    # ---- bf16 weight streaming (halves weight DMA; f32 accumulation) -------
    wx_b, wh_b, bsum_b, meta_b = prepare_rnn_cell_params(
        wx, bx, wh, bh, compute_dtype=jnp.bfloat16)
    y_bf16 = rnn_cell_forward(x, hx, wx_b, wh_b, bsum_b, meta_b,
                              nonlinearity="tanh")
    y_bf16 = jax.block_until_ready(y_bf16)
    assert jnp.allclose(y_bf16.astype(jnp.float32), y_ref_tanh, atol=5e-2)

    print("KERNEL_OK")
</pallas_src>

<mosaic_0001>
module attributes {stable_mosaic.version = 11 : i64} {
  func.func @_rnn_cell_kernel(%arg0: i32, %arg1: i32, %arg2: memref<8x16xf32, #tpu.memory_space<vmem>>, %arg3: memref<8x32xf32, #tpu.memory_space<vmem>>, %arg4: memref<16x128xf32, #tpu.memory_space<vmem>>, %arg5: memref<32x128xf32, #tpu.memory_space<vmem>>, %arg6: memref<1x128xf32, #tpu.memory_space<vmem>>, %arg7: memref<8x128xf32, #tpu.memory_space<vmem>>) attributes {dimension_semantics = [#tpu.dimension_semantics<parallel>, #tpu.dimension_semantics<parallel>], iteration_bounds = array<i64: 1, 1>, scalar_prefetch = 0 : i64, scratch_operands = 0 : i64, tpu.core_type = #tpu.core_type<tc>, window_params = [{transform_indices = @transform_0, window_bounds = array<i64: 8, 16>}, {transform_indices = @transform_1, window_bounds = array<i64: 8, 32>}, {transform_indices = @transform_2, window_bounds = array<i64: 16, 128>}, {transform_indices = @transform_3, window_bounds = array<i64: 32, 128>}, {transform_indices = @transform_4, window_bounds = array<i64: 1, 128>}, {transform_indices = @transform_5, window_bounds = array<i64: 8, 128>}]} {
    %c0 = arith.constant 0 : index
    %c0_0 = arith.constant 0 : index
    %0 = vector.load %arg2[%c0, %c0_0] : memref<8x16xf32, #tpu.memory_space<vmem>>, vector<8x16xf32>
    %c0_1 = arith.constant 0 : index
    %c0_2 = arith.constant 0 : index
    %1 = vector.load %arg4[%c0_1, %c0_2] : memref<16x128xf32, #tpu.memory_space<vmem>>, vector<16x128xf32>
    %cst = arith.constant dense<0.000000e+00> : vector<8x128xf32>
    %2 = tpu.matmul %0, %1, %cst {dimension_numbers = #tpu.dot_dimension_numbers<[1], [0], [0], [1], [0, 0, 1, 1], [], []>} : vector<8x16xf32>, vector<16x128xf32>, vector<8x128xf32> -> vector<8x128xf32>
    %c0_3 = arith.constant 0 : index
    %c0_4 = arith.constant 0 : index
    %3 = vector.load %arg3[%c0_3, %c0_4] : memref<8x32xf32, #tpu.memory_space<vmem>>, vector<8x32xf32>
    %c0_5 = arith.constant 0 : index
    %c0_6 = arith.constant 0 : index
    %4 = vector.load %arg5[%c0_5, %c0_6] : memref<32x128xf32, #tpu.memory_space<vmem>>, vector<32x128xf32>
    %cst_7 = arith.constant dense<0.000000e+00> : vector<8x128xf32>
    %5 = tpu.matmul %3, %4, %cst_7 {dimension_numbers = #tpu.dot_dimension_numbers<[1], [0], [0], [1], [0, 0, 1, 1], [], []>} : vector<8x32xf32>, vector<32x128xf32>, vector<8x128xf32> -> vector<8x128xf32>
    %6 = arith.addf %2, %5 : vector<8x128xf32>
    %c0_8 = arith.constant 0 : index
    %c0_9 = arith.constant 0 : index
    %7 = vector.load %arg6[%c0_8, %c0_9] : memref<1x128xf32, #tpu.memory_space<vmem>>, vector<1x128xf32>
    %8 = vector.broadcast %7 : vector<1x128xf32> to vector<8x128xf32>
    %9 = arith.addf %6, %8 : vector<8x128xf32>
    %10 = math.tanh %9 : vector<8x128xf32>
    %c0_10 = arith.constant 0 : index
    %c0_11 = arith.constant 0 : index
    %11 = vector.load %arg7[%c0_10, %c0_11] : memref<8x128xf32, #tpu.memory_space<vmem>>, vector<8x128xf32>
    tpu.vector_store %arg7[%c0_10, %c0_11], %10 {strides = array<i32>} : memref<8x128xf32, #tpu.memory_space<vmem>>, vector<8x128xf32>,
    return
  }
  func.func @transform_0(%arg0: i32, %arg1: i32) -> (i32, i32) {
    %c0_i32 = arith.constant 0 : i32
    %c0_i32_0 = arith.constant 0 : i32
    return %arg0, %c0_i32 : i32, i32
  }
  func.func @transform_1(%arg0: i32, %arg1: i32) -> (i32, i32) {
    %c0_i32 = arith.constant 0 : i32
    %c0_i32_0 = arith.constant 0 : i32
    return %arg0, %c0_i32 : i32, i32
  }
  func.func @transform_2(%arg0: i32, %arg1: i32) -> (i32, i32) {
    %c0_i32 = arith.constant 0 : i32
    %c0_i32_0 = arith.constant 0 : i32
    return %c0_i32, %arg1 : i32, i32
  }
  func.func @transform_3(%arg0: i32, %arg1: i32) -> (i32, i32) {
    %c0_i32 = arith.constant 0 : i32
    %c0_i32_0 = arith.constant 0 : i32
    return %c0_i32, %arg1 : i32, i32
  }
  func.func @transform_4(%arg0: i32, %arg1: i32) -> (i32, i32) {
    %c0_i32 = arith.constant 0 : i32
    %c0_i32_0 = arith.constant 0 : i32
    return %c0_i32, %arg1 : i32, i32
  }
  func.func @transform_5(%arg0: i32, %arg1: i32) -> (i32, i32) {
    %c0_i32 = arith.constant 0 : i32
    return %arg0, %arg1 : i32, i32
  }
}

</mosaic_0001>

<llo_original>
// kernel: tpu_custom_call.1
$region0: #{tpu_custom_call.1}
  #allocation0 [shape = 'u32[]', space=smem, size = 0x4, offset = 0x4, fixed_abs, tag = 'smem constant byte address 0x4 - core index']
  #allocation1 [shape = 'u32[144,128]{1,0:T(1,128)}', space=vmem, size = 0x12000, scoped, tag = 'internal scratch']
  %s0 = inlined_call_operand.hbm [shape: f32[8,16], index: 0, kind: input, shape index: {}]
  %s1 = inlined_call_operand.hbm [shape: f32[8,32], index: 1, kind: input, shape index: {}]
  %s2 = inlined_call_operand.hbm [shape: f32[16,128], index: 2, kind: input, shape index: {}]
  %s3 = inlined_call_operand.hbm [shape: f32[32,128], index: 3, kind: input, shape index: {}]
  %s4 = inlined_call_operand.vmem [shape: f32[1,128], index: 4, kind: input, shape index: {}]
  %s5 = inlined_call_operand.hbm [shape: f32[8,128], index: 5, kind: output, shape index: {}]
  %s6 = sld [smem:[#allocation0]]
  $region46: #{tpu_custom_call.1} parent=0
    _
  %s8 = ssub.s32 1, %s6
  %s9 = scalar_select 0, %s8, %s6
  $region1: #{tpu_custom_call.1} parent=0
    #allocation2 [shape = 'u8[4096]{0}', space=vmem, size = 0x1000, scoped, tag = 'input window, operand 0, single buffered']
    #allocation3 [shape = 's32[1]{0}', space=sflag, size = 0x4, scoped, tag = 'scoped memory for tpu_custom_call.1']
    #allocation4 [shape = 's32[1]{0}', space=sflag, size = 0x4, scoped, tag = 'scoped memory for tpu_custom_call.1']
    #allocation5 [shape = 'u8[4096]{0}', space=vmem, size = 0x1000, scoped, tag = 'input window, operand 1, single buffered']
    #allocation6 [shape = 's32[1]{0}', space=sflag, size = 0x4, scoped, tag = 'scoped memory for tpu_custom_call.1']
    #allocation7 [shape = 'u8[8192]{0}', space=vmem, size = 0x2000, scoped, tag = 'input window, operand 2, single buffered']
    #allocation8 [shape = 'u8[16384]{0}', space=vmem, size = 0x4000, scoped, tag = 'input window, operand 3, single buffered']
    #allocation9 [shape = 's32[1]{0}', space=sflag, size = 0x4, scoped, tag = 'scoped memory for tpu_custom_call.1']
    #allocation10 [shape = 'u8[4096]{0}', space=vmem, size = 0x1000, scoped, tag = 'output window, operand 0, single buffered']
    %10 = vsyncpa [#allocation3], 0
    %11 = vsyncpa [#allocation6], 0
    %12 = vsyncpa [#allocation9], 0
    %13 = vsyncpa [#allocation4], 0
    // Predicated region
    $region2: #{tpu_custom_call.1} parent=1 // pred_check
      _
    $region3: #{tpu_custom_call.1} parent=1 // pred_check_branch
      %15 = sbr.rel (0) target = $region5
    $region4: #{tpu_custom_call.1} parent=1 // pred_region
      %s17 = ssub.s32 128, 128
      %18 = vsyncadd [#allocation3], %s17
      %s20 = sshll.u32 [#allocation2], 4
      %s21 = int_to_ptr.vmem [resolvable:$true] %s20
      %23 = dma.hbm_to_vmem [thread:$0]  %s0, 128, %s21, [#allocation3]
    $region5: #{tpu_custom_call.1} parent=1 // pred_fallthru
      _
    // Predicated region
    $region6: #{tpu_custom_call.1} parent=1 // pred_check
      _
    $region7: #{tpu_custom_call.1} parent=1 // pred_check_branch
      %25 = sbr.rel (0) target = $region9
    $region8: #{tpu_custom_call.1} parent=1 // pred_region
      %s27 = ssub.s32 128, 128
      %28 = vsyncadd [#allocation6], %s27
      %s30 = sshll.u32 [#allocation5], 4
      %s31 = int_to_ptr.vmem [resolvable:$true] %s30
      %33 = dma.hbm_to_vmem [thread:$0]  %s1, 128, %s31, [#allocation6]
    $region9: #{tpu_custom_call.1} parent=1 // pred_fallthru
      _
    // Predicated region
    $region10: #{tpu_custom_call.1} parent=1 // pred_check
      _
    $region11: #{tpu_custom_call.1} parent=1 // pred_check_branch
      %35 = sbr.rel (0) target = $region13
    $region12: #{tpu_custom_call.1} parent=1 // pred_region
      %s37 = ssub.s32 256, 256
      %38 = vsyncadd [#allocation6], %s37
      %s39 = sshll.u32 [#allocation7], 4
      %s40 = int_to_ptr.vmem [resolvable:$true] %s39
      %45 = dma.hbm_to_vmem [thread:$0]  %s2, 256, %s40, [#allocation6], 128, 128, 8
    $region13: #{tpu_custom_call.1} parent=1 // pred_fallthru
      _
    // Predicated region
    $region14: #{tpu_custom_call.1} parent=1 // pred_check
      _
    $region15: #{tpu_custom_call.1} parent=1 // pred_check_branch
      %47 = sbr.rel (0) target = $region17
    $region16: #{tpu_custom_call.1} parent=1 // pred_region
      %s49 = ssub.s32 512, 512
      %50 = vsyncadd [#allocation9], %s49
      %s51 = sshll.u32 [#allocation8], 4
      %s52 = int_to_ptr.vmem [resolvable:$true] %s51
      %57 = dma.hbm_to_vmem [thread:$0]  %s3, 512, %s52, [#allocation9], 128, 128, 8
    $region17: #{tpu_custom_call.1} parent=1 // pred_fallthru
      _
    // Predicated region
    $region18: #{tpu_custom_call.1} parent=1 // pred_check
      _
    $region19: #{tpu_custom_call.1} parent=1 // pred_check_branch
      %59 = sbr.rel (0) target = $region21
    $region20: #{tpu_custom_call.1} parent=1 // pred_region
      _
    $region21: #{tpu_custom_call.1} parent=1 // pred_fallthru
      _
    // Predicated region
    $region22: #{tpu_custom_call.1} parent=1 // pred_check
      _
    $region23: #{tpu_custom_call.1} parent=1 // pred_check_branch
      %61 = sbr.rel (0) target = $region25
    $region24: #{tpu_custom_call.1} parent=1 // pred_region
      %62 = dma.done [#allocation3], 128
    $region25: #{tpu_custom_call.1} parent=1 // pred_fallthru
      _
    // Predicated region
    $region26: #{tpu_custom_call.1} parent=1 // pred_check
      _
    $region27: #{tpu_custom_call.1} parent=1 // pred_check_branch
      %64 = sbr.rel (0) target = $region29
    $region28: #{tpu_custom_call.1} parent=1 // pred_region
      %65 = dma.done [#allocation6], 128
    $region29: #{tpu_custom_call.1} parent=1 // pred_fallthru
      _
    // Predicated region
    $region30: #{tpu_custom_call.1} parent=1 // pred_check
      _
    $region31: #{tpu_custom_call.1} parent=1 // pred_check_branch
      %67 = sbr.rel (0) target = $region33
    $region32: #{tpu_custom_call.1} parent=1 // pred_region
      %68 = dma.done [#allocation6], 256
    $region33: #{tpu_custom_call.1} parent=1 // pred_fallthru
      _
    // Predicated region
    $region34: #{tpu_custom_call.1} parent=1 // pred_check
      _
    $region35: #{tpu_custom_call.1} parent=1 // pred_check_branch
      %70 = sbr.rel (0) target = $region37
    $region36: #{tpu_custom_call.1} parent=1 // pred_region
      %71 = dma.done [#allocation9], 512
    $region37: #{tpu_custom_call.1} parent=1 // pred_fallthru
      _
    %v72 = vld [vmem:[#allocation2] sm:$0xff]
    %v73 = vld [vmem:[#allocation7] sm:$0xff]
    %v74 = vld [vmem:[#allocation7 + $0x8] sm:$0xff]
    %v75 = vld [vmem:[#allocation5] sm:$0xff]
    %v76 = vld [vmem:[#allocation8] sm:$0xff]
    %v77 = vld [vmem:[#allocation8 + $0x8] sm:$0xff]
    %v78 = vld [vmem:[#allocation8 + $0x10] sm:$0xff]
    %v79 = vld [vmem:[#allocation8 + $0x18] sm:$0xff]
    %vm80 = vcmask 261120
    %v82 = vsel %vm80, %v75, 0
    %84 = vmatprep.subr.mxu0 0.0
    %85 = vmatpush1.msra.mxu0 0.0
    %86 = vmatprep.subr.mxu0 0.0
    %87 = vmatpush1.msra.mxu0 0.0
    %88 = vmatprep.subr.mxu0 0.0
    %89 = vmatpush1.msra.mxu0 0.0
    %90 = vmatprep.subr.mxu0 0.0
    %91 = vmatpush1.msra.mxu0 0.0
    %92 = vmatprep.subr.mxu0 0.0
    %93 = vmatpush1.msra.mxu0 0.0
    %94 = vmatprep.subr.mxu0 0.0
    %95 = vmatpush1.msra.mxu0 0.0
    %96 = vmatprep.subr.mxu0 0.0
    %97 = vmatpush1.msra.mxu0 0.0
    %98 = vmatprep.subr.mxu0 0.0
    %99 = vmatpush1.msra.mxu0 0.0
    %100 = vmatprep.subr.mxu0 0.0
    %101 = vmatpush1.msra.mxu0 0.0
    %102 = vmatprep.subr.mxu0 0.0
    %103 = vmatpush1.msra.mxu0 0.0
    %104 = vmatprep.subr.mxu0 0.0
    %105 = vmatpush1.msra.mxu0 0.0
    %106 = vmatprep.subr.mxu0 0.0
    %107 = vmatpush1.msra.mxu0 0.0
    %108 = vmatprep.subr.mxu0 0.0
    %109 = vmatpush1.msra.mxu0 %v79
    %110 = vmatprep.subr.mxu0 0.0
    %111 = vmatpush1.msra.mxu0 %v78
    %112 = vmatprep.subr.mxu0 0.0
    %113 = vmatpush1.msra.mxu0 %v77
    %114 = vmatprep.subr.mxu0 0.0
    %115 = vmatpush1.msra.mxu0 %v76
    %116 = vmatprep.subr.mxu0 0.0
    %117 = vmatpush2.msra.mxu0 0.0
    %118 = vmatprep.subr.mxu0 0.0
    %119 = vmatpush2.msra.mxu0 0.0
    %120 = vmatprep.subr.mxu0 0.0
    %121 = vmatpush2.msra.mxu0 0.0
    %122 = vmatprep.subr.mxu0 0.0
    %123 = vmatpush2.msra.mxu0 0.0
    %124 = vmatprep.subr.mxu0 0.0
    %125 = vmatpush2.msra.mxu0 0.0
    %126 = vmatprep.subr.mxu0 0.0
    %127 = vmatpush2.msra.mxu0 0.0
    %128 = vmatprep.subr.mxu0 0.0
    %129 = vmatpush2.msra.mxu0 0.0
    %130 = vmatprep.subr.mxu0 0.0
    %131 = vmatpush2.msra.mxu0 0.0
    %132 = vmatprep.subr.mxu0 0.0
    %133 = vmatpush2.msra.mxu0 0.0
    %134 = vmatprep.subr.mxu0 0.0
    %135 = vmatpush2.msra.mxu0 0.0
    %136 = vmatprep.subr.mxu0 0.0
    %137 = vmatpush2.msra.mxu0 0.0
    %138 = vmatprep.subr.mxu0 0.0
    %139 = vmatpush2.msra.mxu0 0.0
    %140 = vmatprep.subr.mxu0 0.0
    %141 = vmatpush2.msra.mxu0 0.0
    %142 = vmatprep.subr.mxu0 0.0
    %143 = vmatpush2.msra.mxu0 0.0
    %144 = vmatprep.subr.mxu0 0.0
    %145 = vmatpush2.msra.mxu0 0.0
    %146 = vmatprep.subr.mxu0 0.0
    %147 = vmatpush2.msra.mxu0 0.0
    %148 = vmatprep.mubr.f32.mxu0 0.0
    %149 = vmatmul.mubr.f32.gmra.mxu0 %v82
    %v150 = vpop.f32.mrf.mxu0
    %v151 = vadd.f32 0.0, %v150
    %v152 = vpop.f32.mrf.mxu0
    %153 = vdwg.mxu0
    %vm154 = vcmask 130048
    %v156 = vsel %vm154, %v72, 0
    %158 = vmatprep.subr.mxu0 0.0
    %159 = vmatpush1.msra.mxu0 0.0
    %160 = vmatprep.subr.mxu0 0.0
    %161 = vmatpush1.msra.mxu0 0.0
    %162 = vmatprep.subr.mxu0 0.0
    %163 = vmatpush1.msra.mxu0 0.0
    %164 = vmatprep.subr.mxu0 0.0
    %165 = vmatpush1.msra.mxu0 0.0
    %166 = vmatprep.subr.mxu0 0.0
    %167 = vmatpush1.msra.mxu0 0.0
    %168 = vmatprep.subr.mxu0 0.0
    %169 = vmatpush1.msra.mxu0 0.0
    %170 = vmatprep.subr.mxu0 0.0
    %171 = vmatpush1.msra.mxu0 0.0
    %172 = vmatprep.subr.mxu0 0.0
    %173 = vmatpush1.msra.mxu0 0.0
    %174 = vmatprep.subr.mxu0 0.0
    %175 = vmatpush1.msra.mxu0 0.0
    %176 = vmatprep.subr.mxu0 0.0
    %177 = vmatpush1.msra.mxu0 0.0
    %178 = vmatprep.subr.mxu0 0.0
    %179 = vmatpush1.msra.mxu0 0.0
    %180 = vmatprep.subr.mxu0 0.0
    %181 = vmatpush1.msra.mxu0 0.0
    %182 = vmatprep.subr.mxu0 0.0
    %183 = vmatpush1.msra.mxu0 0.0
    %184 = vmatprep.subr.mxu0 0.0
    %185 = vmatpush1.msra.mxu0 0.0
    %186 = vmatprep.subr.mxu0 0.0
    %187 = vmatpush1.msra.mxu0 %v74
    %188 = vmatprep.subr.mxu0 0.0
    %189 = vmatpush1.msra.mxu0 %v73
    %190 = vmatprep.subr.mxu0 0.0
    %191 = vmatpush2.msra.mxu0 0.0
    %192 = vmatprep.subr.mxu0 0.0
    %193 = vmatpush2.msra.mxu0 0.0
    %194 = vmatprep.subr.mxu0 0.0
    %195 = vmatpush2.msra.mxu0 0.0
    %196 = vmatprep.subr.mxu0 0.0
    %197 = vmatpush2.msra.mxu0 0.0
    %198 = vmatprep.subr.mxu0 0.0
    %199 = vmatpush2.msra.mxu0 0.0
    %200 = vmatprep.subr.mxu0 0.0
    %201 = vmatpush2.msra.mxu0 0.0
    %202 = vmatprep.subr.mxu0 0.0
    %203 = vmatpush2.msra.mxu0 0.0
    %204 = vmatprep.subr.mxu0 0.0
    %205 = vmatpush2.msra.mxu0 0.0
    %206 = vmatprep.subr.mxu0 0.0
    %207 = vmatpush2.msra.mxu0 0.0
    %208 = vmatprep.subr.mxu0 0.0
    %209 = vmatpush2.msra.mxu0 0.0
    %210 = vmatprep.subr.mxu0 0.0
    %211 = vmatpush2.msra.mxu0 0.0
    %212 = vmatprep.subr.mxu0 0.0
    %213 = vmatpush2.msra.mxu0 0.0
    %214 = vmatprep.subr.mxu0 0.0
    %215 = vmatpush2.msra.mxu0 0.0
    %216 = vmatprep.subr.mxu0 0.0
    %217 = vmatpush2.msra.mxu0 0.0
    %218 = vmatprep.subr.mxu0 0.0
    %219 = vmatpush2.msra.mxu0 0.0
    %220 = vmatprep.subr.mxu0 0.0
    %221 = vmatpush2.msra.mxu0 0.0
    %222 = vmatprep.mubr.f32.mxu0 0.0
    %223 = vmatmul.mubr.f32.gmra.mxu0 %v156
    %v224 = vpop.f32.mrf.mxu0
    %v225 = vadd.f32 %v151, %v224
    %v226 = vpop.f32.mrf.mxu0
    %227 = vdwg.mxu0
    %v228 = vld [vmem:[%s4] sm:$0x1]
    %v230 = vlaneseq
    %v231 = vshrl.u32 %v230, 7
    %v232 = vsub.s32 0, %v231
    %v233 = vrot.slane %v228, %v232
    %v235 = vadd.f32 %v225, %v233
    %v236 = vtanh.pop %v235
    %237 = vst [vmem:[#allocation10] sm:$0xff] %v236
    // Predicated region
    $region38: #{tpu_custom_call.1} parent=1 // pred_check
      _
    $region39: #{tpu_custom_call.1} parent=1 // pred_check_branch
      %239 = sbr.rel (0) target = $region41
    $region40: #{tpu_custom_call.1} parent=1 // pred_region
      %s241 = ssub.s32 128, 128
      %242 = vsyncadd [#allocation4], %s241
      %s244 = sshll.u32 [#allocation10], 4
      %s245 = int_to_ptr.vmem [resolvable:$true] %s244
      %247 = dma.vmem_to_hbm [thread:$0]  %s245, 128, %s5, [#allocation4]
    $region41: #{tpu_custom_call.1} parent=1 // pred_fallthru
      _
    // Predicated region
    $region42: #{tpu_custom_call.1} parent=1 // pred_check
      _
    $region43: #{tpu_custom_call.1} parent=1 // pred_check_branch
      %249 = sbr.rel (0) target = $region45
    $region44: #{tpu_custom_call.1} parent=1 // pred_region
      %250 = dma.done [#allocation4], 128
    $region45: #{tpu_custom_call.1} parent=1 // pred_fallthru
      _
    %251 = vsyncpa [#allocation3], 1
    %252 = vsyncpa [#allocation6], 1
    %253 = vsyncpa [#allocation9], 1
    %254 = vsyncpa [#allocation4], 1

</llo_original>
